<compile_context>
chip_gen: v7x
topology: tpu7x:2x2x1
jax: 0.10.0
libtpu: 0.0.40
codegen_flags: <defaults>
</compile_context>

<pallas_src>
import functools

import jax
import jax.numpy as jnp
import numpy as np
from jax.experimental import pallas as pl
from jax.experimental.pallas import tpu as pltpu


# -----------------------------------------------------------------------------
# helpers
# -----------------------------------------------------------------------------
def _round_up(x: int, m: int) -> int:
    return ((x + m - 1) // m) * m


def _vmem_tile_bytes(shape, dtype) -> int:
    """VMEM bytes of one buffer of `shape`/`dtype`, incl. (sublane,lane) tile
    padding: f32 tiles are (8,128), bf16 tiles are (16,128)."""
    shape = tuple(int(d) for d in shape)
    if len(shape) == 1:
        shape = (1,) + shape
    itemsize = int(np.dtype(dtype).itemsize)
    sublane = 8 * (4 // itemsize)
    lead = 1
    for d in shape[:-2]:
        lead *= d
    return lead * _round_up(shape[-2], sublane) * _round_up(shape[-1], 128) * itemsize


# -----------------------------------------------------------------------------
# Fused kernel: banded conv GEMM + bias + ReLU + (pool folded into FC head)
#
#   grid = (N,)   one image per step ("parallel" -> megacore on v7x)
#   x      block : [1, Hp_pad, Wp*Cin]   bf16  (streamed, ~1.1x raw image bytes)
#   wband  block : [KH, Wp*Cin, W*Cout]  bf16  (resident banded conv weights)
#   b_tile block : [1, W*Cout]           f32   (resident, bias tiled per (w,co))
#   w_head block : [W*Cout, NCpad]       f32   (resident, = tile(w_fc)/HW)
#   b_fc   block : [1, NCpad]            f32   (resident)
#   out          : [1, 1, NCpad]         f32   (lane-dense store)
#   y_acc        : VMEM [Hp_pad, W*Cout] f32   scratch for each banded GEMM
# -----------------------------------------------------------------------------
def _conv_pool_fc_kernel(x_ref, wband_ref, bias_ref, whead_ref, bfc_ref,
                         o_ref, y_acc, *, H, KH):
    x = x_ref[0]                                              # [Hp_pad, Wp*Cin] bf16
    wcout = y_acc.shape[1]

    # conv[h, w*Cout+co] = sum_dh (x @ Wband[dh])[h+dh, w*Cout+co]
    conv = jnp.zeros((H, wcout), jnp.float32)
    for dh in range(KH):                                      # KH=3, unrolled
        y_acc[...] = jnp.dot(x, wband_ref[dh],
                             preferred_element_type=jnp.float32)  # MXU, f32 acc
        conv = conv + y_acc[dh:dh + H, :]                     # aligned-lane offset load

    conv = jnp.maximum(conv + bias_ref[...], 0.0)             # bias + ReLU (f32 VPU)

    # global-avg-pool + FC head:
    #   pool over H = one small sublane reduce; pool over W + 1/HW + FC weight
    #   are pre-folded into w_head, so the rest is a single MXU matmul.
    rowsum = jnp.sum(conv, axis=0, keepdims=True)             # [1, W*Cout]
    logits = jnp.dot(rowsum, whead_ref[...],
                     preferred_element_type=jnp.float32) + bfc_ref[...]
    o_ref[0] = logits.astype(o_ref.dtype)                     # [1, NCpad] lane-dense


def fused_conv_pool_fc(xp2d, wband, b_tile, w_head, b_fc, *, H):
    N, Hp_pad, WpCin = xp2d.shape
    KH, _, WCout = wband.shape
    NCpad = w_head.shape[1]
    assert Hp_pad >= H + KH - 1

    # Exact VMEM budget (review #5/#6): every BlockSpec'd operand is
    # double-buffered by the pipeline (constant index maps included), plus the
    # f32 scratch and a few conv-sized in-kernel temps.  ~350 KiB here.
    dbuf = 2
    vmem_bytes = (
        dbuf * _vmem_tile_bytes((1, Hp_pad, WpCin), xp2d.dtype)   # streamed image
        + dbuf * _vmem_tile_bytes(wband.shape, wband.dtype)        # resident band weights
        + dbuf * _vmem_tile_bytes(b_tile.shape, b_tile.dtype)
        + dbuf * _vmem_tile_bytes(w_head.shape, w_head.dtype)
        + dbuf * _vmem_tile_bytes(b_fc.shape, b_fc.dtype)
        + dbuf * _vmem_tile_bytes((1, 1, NCpad), jnp.float32)      # output block
        + _vmem_tile_bytes((Hp_pad, WCout), jnp.float32)           # y_acc scratch
        + 4 * _vmem_tile_bytes((Hp_pad, WCout), jnp.float32)       # conv/relu/mm temps
    )
    vmem_bytes = int(min(_round_up(vmem_bytes, 1 << 20) + (1 << 20), 16 << 20))

    kernel = functools.partial(_conv_pool_fc_kernel, H=H, KH=KH)

    out = pl.pallas_call(
        kernel,
        out_shape=jax.ShapeDtypeStruct((N, 1, NCpad), jnp.float32),
        grid_spec=pltpu.PrefetchScalarGridSpec(
            num_scalar_prefetch=0,
            grid=(N,),
            in_specs=[
                # streamed padded image (tiny -> default double-buffering is
                # enough; switch to pipeline_mode=pl.Buffered(3) only if xprof
                # ever shows exposed DMA here).
                pl.BlockSpec((1, Hp_pad, WpCin), lambda n: (n, 0, 0)),
                # resident weights / biases (constant block index -> no re-DMA)
                pl.BlockSpec((KH, WpCin, WCout), lambda n: (0, 0, 0)),
                pl.BlockSpec((1, WCout), lambda n: (0, 0)),
                pl.BlockSpec((WCout, NCpad), lambda n: (0, 0)),
                pl.BlockSpec((1, NCpad), lambda n: (0, 0)),
            ],
            out_specs=pl.BlockSpec((1, 1, NCpad), lambda n: (n, 0, 0)),
            scratch_shapes=[pltpu.VMEM((Hp_pad, WCout), jnp.float32)],
        ),
        compiler_params=pltpu.CompilerParams(
            dimension_semantics=("parallel",),      # batch axis over v7x's 2 TCs
            vmem_limit_bytes=vmem_bytes,
        ),
    )(xp2d, wband, b_tile, w_head, b_fc)
    return out.reshape(N, NCpad)


# -----------------------------------------------------------------------------
# one-time parameter packing (would run at model init, not per step)
# -----------------------------------------------------------------------------
def pack_params(params, H, W, stream_dtype=jnp.bfloat16):
    w_conv, b_conv, w_fc, b_fc = params
    KH, KW, Cin, Cout = w_conv.shape
    NC = w_fc.shape[1]
    pw = (KW - 1) // 2
    Wp = W + 2 * pw
    WCout = W * Cout
    NCpad = _round_up(NC, 128)

    # banded conv weight: wband[dh, (w+dw)*Cin+ci, w*Cout+co] = w_conv[dh,dw,ci,co]
    dh_i, w_i, dw_i, ci_i, co_i = np.meshgrid(
        np.arange(KH), np.arange(W), np.arange(KW), np.arange(Cin), np.arange(Cout),
        indexing="ij")
    j_i = (w_i + dw_i) * Cin + ci_i
    q_i = w_i * Cout + co_i
    vals = w_conv[dh_i, dw_i, ci_i, co_i]                         # gather (f32)
    wband = jnp.zeros((KH, Wp * Cin, WCout), jnp.float32)
    wband = wband.at[dh_i, j_i, q_i].set(vals).astype(stream_dtype)

    # bias tiled per (w, co); FC head weight tiled over w and pre-scaled by 1/HW
    # so the average pool over W happens on the MXU inside the head matmul.
    b_tile = jnp.tile(b_conv.reshape(1, Cout), (1, W)).astype(jnp.float32)
    w_head = (jnp.tile(w_fc, (W, 1)) / float(H * W)).astype(jnp.float32)
    w_head = jnp.pad(w_head, ((0, 0), (0, NCpad - NC)))
    b_fc_p = jnp.pad(b_fc.reshape(1, NC).astype(jnp.float32), ((0, 0), (0, NCpad - NC)))
    return wband, b_tile, w_head, b_fc_p


def pack_inputs(x_nchw, KH, KW, stream_dtype=jnp.bfloat16):
    """NCHW -> zero-padded, row-padded, (W,Cin)-flattened bf16 image stream."""
    N, Cin, H, W = x_nchw.shape
    ph, pw = (KH - 1) // 2, (KW - 1) // 2
    x = jnp.transpose(x_nchw, (0, 2, 3, 1))                       # [N, H, W, Cin]
    xp = jnp.pad(x, ((0, 0), (ph, ph), (pw, pw), (0, 0)))         # spatial SAME pad
    Hp, Wp = H + 2 * ph, W + 2 * pw
    Hp_pad = _round_up(Hp, 8)                                     # sublane-friendly rows
    xp = jnp.pad(xp, ((0, 0), (0, Hp_pad - Hp), (0, 0), (0, 0)))
    return xp.reshape(N, Hp_pad, Wp * Cin).astype(stream_dtype)


# -----------------------------------------------------------------------------
# ComposerModel-equivalent forward: batch = (inputs, targets); return model(inputs)
# -----------------------------------------------------------------------------
def composer_forward(batch, params):
    inputs, _targets = batch                      # unpack the dataloader batch
    N, Cin, H, W = inputs.shape
    w_conv, b_conv, w_fc, b_fc = params
    KH, KW = w_conv.shape[0], w_conv.shape[1]
    NC = w_fc.shape[1]

    xp2d = pack_inputs(inputs, KH, KW)                            # the only streamed tensor
    wband, b_tile, w_head, b_fc_p = pack_params(params, H, W)     # one-time weight pack

    logits_pad = fused_conv_pool_fc(xp2d, wband, b_tile, w_head, b_fc_p, H=H)
    return logits_pad[:, :NC]


def reference_forward(batch, params):
    """Pure-JAX f32 reference mirroring the PyTorch semantics."""
    inputs, _ = batch
    w_conv, b_conv, w_fc, b_fc = params
    x = jnp.transpose(inputs, (0, 2, 3, 1))
    y = jax.lax.conv_general_dilated(
        x, w_conv, window_strides=(1, 1), padding="SAME",
        dimension_numbers=("NHWC", "HWIO", "NHWC"))
    y = jax.nn.relu(y + b_conv[0])
    pooled = jnp.mean(y, axis=(1, 2))
    return pooled @ w_fc + b_fc[0]


if __name__ == "__main__":
    # Small shapes consistent with an image-classification ComposerModel.
    N, Cin, H, W = 2, 4, 16, 16
    Cout, KH, KW, NUM_CLASSES = 8, 3, 3, 10

    key = jax.random.PRNGKey(0)
    k_x, k_wc, k_bc, k_wf, k_bf, k_t = jax.random.split(key, 6)

    inputs = jax.random.normal(k_x, (N, Cin, H, W), dtype=jnp.float32)
    targets = jax.random.randint(k_t, (N,), 0, NUM_CLASSES)
    batch = (inputs, targets)

    # Deterministic synthetic parameters (shapes implied by the model).
    w_conv = jax.random.normal(k_wc, (KH, KW, Cin, Cout), dtype=jnp.float32) * 0.1
    b_conv = jax.random.normal(k_bc, (1, Cout), dtype=jnp.float32) * 0.1
    w_fc = jax.random.normal(k_wf, (Cout, NUM_CLASSES), dtype=jnp.float32) * 0.1
    b_fc = jax.random.normal(k_bf, (1, NUM_CLASSES), dtype=jnp.float32) * 0.1
    params = (w_conv, b_conv, w_fc, b_fc)

    logits = composer_forward(batch, params)
    jax.block_until_ready(logits)

    # Tolerance loosened for the bf16 image/weight stream (f32 MXU accumulation).
    ref = reference_forward(batch, params)
    np.testing.assert_allclose(np.asarray(logits), np.asarray(ref),
                               rtol=2e-2, atol=2e-2)
    assert logits.shape == (N, NUM_CLASSES)
    print("KERNEL_OK")
</pallas_src>

<mosaic_0001>
module attributes {stable_mosaic.version = 11 : i64} {
  func.func @_conv_pool_fc_kernel(%arg0: i32, %arg1: memref<1x24x72xbf16, #tpu.memory_space<vmem>>, %arg2: memref<3x72x128xbf16, #tpu.memory_space<vmem>>, %arg3: memref<1x128xf32, #tpu.memory_space<vmem>>, %arg4: memref<128x128xf32, #tpu.memory_space<vmem>>, %arg5: memref<1x128xf32, #tpu.memory_space<vmem>>, %arg6: memref<1x1x128xf32, #tpu.memory_space<vmem>>, %arg7: memref<24x128xf32, #tpu.memory_space<vmem>>) attributes {dimension_semantics = [#tpu.dimension_semantics<parallel>], iteration_bounds = array<i64: 2>, scalar_prefetch = 0 : i64, scratch_operands = 1 : i64, tpu.core_type = #tpu.core_type<tc>, window_params = [{transform_indices = @transform_0, window_bounds = array<i64: 1, 24, 72>}, {pipeline_mode = #tpu.pipeline_mode<synchronous>, transform_indices = @transform_1, window_bounds = array<i64: 3, 72, 128>}, {pipeline_mode = #tpu.pipeline_mode<synchronous>, transform_indices = @transform_2, window_bounds = array<i64: 1, 128>}, {pipeline_mode = #tpu.pipeline_mode<synchronous>, transform_indices = @transform_3, window_bounds = array<i64: 128, 128>}, {pipeline_mode = #tpu.pipeline_mode<synchronous>, transform_indices = @transform_4, window_bounds = array<i64: 1, 128>}, {transform_indices = @transform_5, window_bounds = array<i64: 1, 1, 128>}]} {
    %c0 = arith.constant 0 : index
    %c0_0 = arith.constant 0 : index
    %c0_1 = arith.constant 0 : index
    %0 = vector.load %arg1[%c0, %c0_0, %c0_1] : memref<1x24x72xbf16, #tpu.memory_space<vmem>>, vector<1x24x72xbf16>
    %1 = vector.shape_cast %0 : vector<1x24x72xbf16> to vector<24x72xbf16>
    %cst = arith.constant 0.000000e+00 : f32
    %2 = vector.broadcast %cst : f32 to vector<16x128xf32>
    %c0_2 = arith.constant 0 : index
    %c0_3 = arith.constant 0 : index
    %c0_4 = arith.constant 0 : index
    %3 = vector.load %arg2[%c0_2, %c0_3, %c0_4] : memref<3x72x128xbf16, #tpu.memory_space<vmem>>, vector<1x72x128xbf16>
    %4 = vector.shape_cast %3 : vector<1x72x128xbf16> to vector<72x128xbf16>
    %cst_5 = arith.constant dense<0.000000e+00> : vector<24x128xf32>
    %5 = tpu.matmul %1, %4, %cst_5 {dimension_numbers = #tpu.dot_dimension_numbers<[1], [0], [0], [1], [0, 0, 1, 1], [], []>} : vector<24x72xbf16>, vector<72x128xbf16>, vector<24x128xf32> -> vector<24x128xf32>
    %c0_6 = arith.constant 0 : index
    %c0_7 = arith.constant 0 : index
    %6 = vector.load %arg7[%c0_6, %c0_7] : memref<24x128xf32, #tpu.memory_space<vmem>>, vector<24x128xf32>
    tpu.vector_store %arg7[%c0_6, %c0_7], %5 {strides = array<i32>} : memref<24x128xf32, #tpu.memory_space<vmem>>, vector<24x128xf32>,
    %c0_8 = arith.constant 0 : index
    %c0_9 = arith.constant 0 : index
    %7 = vector.load %arg7[%c0_8, %c0_9] : memref<24x128xf32, #tpu.memory_space<vmem>>, vector<16x128xf32>
    %8 = arith.addf %2, %7 : vector<16x128xf32>
    %c1 = arith.constant 1 : index
    %c0_10 = arith.constant 0 : index
    %c0_11 = arith.constant 0 : index
    %9 = vector.load %arg2[%c1, %c0_10, %c0_11] : memref<3x72x128xbf16, #tpu.memory_space<vmem>>, vector<1x72x128xbf16>
    %10 = vector.shape_cast %9 : vector<1x72x128xbf16> to vector<72x128xbf16>
    %cst_12 = arith.constant dense<0.000000e+00> : vector<24x128xf32>
    %11 = tpu.matmul %1, %10, %cst_12 {dimension_numbers = #tpu.dot_dimension_numbers<[1], [0], [0], [1], [0, 0, 1, 1], [], []>} : vector<24x72xbf16>, vector<72x128xbf16>, vector<24x128xf32> -> vector<24x128xf32>
    %c0_13 = arith.constant 0 : index
    %c0_14 = arith.constant 0 : index
    %12 = vector.load %arg7[%c0_13, %c0_14] : memref<24x128xf32, #tpu.memory_space<vmem>>, vector<24x128xf32>
    tpu.vector_store %arg7[%c0_13, %c0_14], %11 {strides = array<i32>} : memref<24x128xf32, #tpu.memory_space<vmem>>, vector<24x128xf32>,
    %c1_15 = arith.constant 1 : index
    %c0_16 = arith.constant 0 : index
    %13 = vector.load %arg7[%c1_15, %c0_16] : memref<24x128xf32, #tpu.memory_space<vmem>>, vector<16x128xf32>
    %14 = arith.addf %8, %13 : vector<16x128xf32>
    %c2 = arith.constant 2 : index
    %c0_17 = arith.constant 0 : index
    %c0_18 = arith.constant 0 : index
    %15 = vector.load %arg2[%c2, %c0_17, %c0_18] : memref<3x72x128xbf16, #tpu.memory_space<vmem>>, vector<1x72x128xbf16>
    %16 = vector.shape_cast %15 : vector<1x72x128xbf16> to vector<72x128xbf16>
    %cst_19 = arith.constant dense<0.000000e+00> : vector<24x128xf32>
    %17 = tpu.matmul %1, %16, %cst_19 {dimension_numbers = #tpu.dot_dimension_numbers<[1], [0], [0], [1], [0, 0, 1, 1], [], []>} : vector<24x72xbf16>, vector<72x128xbf16>, vector<24x128xf32> -> vector<24x128xf32>
    %c0_20 = arith.constant 0 : index
    %c0_21 = arith.constant 0 : index
    %18 = vector.load %arg7[%c0_20, %c0_21] : memref<24x128xf32, #tpu.memory_space<vmem>>, vector<24x128xf32>
    tpu.vector_store %arg7[%c0_20, %c0_21], %17 {strides = array<i32>} : memref<24x128xf32, #tpu.memory_space<vmem>>, vector<24x128xf32>,
    %c2_22 = arith.constant 2 : index
    %c0_23 = arith.constant 0 : index
    %19 = vector.load %arg7[%c2_22, %c0_23] : memref<24x128xf32, #tpu.memory_space<vmem>>, vector<16x128xf32>
    %20 = arith.addf %14, %19 : vector<16x128xf32>
    %c0_24 = arith.constant 0 : index
    %c0_25 = arith.constant 0 : index
    %21 = vector.load %arg3[%c0_24, %c0_25] : memref<1x128xf32, #tpu.memory_space<vmem>>, vector<1x128xf32>
    %22 = vector.broadcast %21 : vector<1x128xf32> to vector<16x128xf32>
    %23 = arith.addf %20, %22 : vector<16x128xf32>
    %cst_26 = arith.constant 0.000000e+00 : f32
    %24 = vector.broadcast %cst_26 : f32 to vector<16x128xf32>
    %25 = arith.maximumf %23, %24 : vector<16x128xf32>
    %cst_27 = arith.constant dense<0.000000e+00> : vector<128xf32>
    %26 = vector.multi_reduction <add>, %25, %cst_27 [0] : vector<16x128xf32> to vector<128xf32>
    %27 = vector.shape_cast %26 : vector<128xf32> to vector<1x128xf32>
    %c0_28 = arith.constant 0 : index
    %c0_29 = arith.constant 0 : index
    %28 = vector.load %arg4[%c0_28, %c0_29] : memref<128x128xf32, #tpu.memory_space<vmem>>, vector<128x128xf32>
    %cst_30 = arith.constant dense<0.000000e+00> : vector<1x128xf32>
    %29 = tpu.matmul %27, %28, %cst_30 {dimension_numbers = #tpu.dot_dimension_numbers<[1], [0], [0], [1], [0, 0, 1, 1], [], []>} : vector<1x128xf32>, vector<128x128xf32>, vector<1x128xf32> -> vector<1x128xf32>
    %c0_31 = arith.constant 0 : index
    %c0_32 = arith.constant 0 : index
    %30 = vector.load %arg5[%c0_31, %c0_32] : memref<1x128xf32, #tpu.memory_space<vmem>>, vector<1x128xf32>
    %31 = arith.addf %29, %30 : vector<1x128xf32>
    %c0_33 = arith.constant 0 : index
    %c0_34 = arith.constant 0 : index
    %c0_35 = arith.constant 0 : index
    %32 = vector.load %arg6[%c0_33, %c0_34, %c0_35] : memref<1x1x128xf32, #tpu.memory_space<vmem>>, vector<1x1x128xf32>
    %33 = vector.shape_cast %32 : vector<1x1x128xf32> to vector<1x128xf32>
    %34 = vector.shape_cast %31 : vector<1x128xf32> to vector<1x1x128xf32>
    tpu.vector_store %arg6[%c0_33, %c0_34, %c0_35], %34 {strides = array<i32>} : memref<1x1x128xf32, #tpu.memory_space<vmem>>, vector<1x1x128xf32>,
    return
  }
  func.func @transform_0(%arg0: i32) -> (i32, i32, i32) {
    %c0_i32 = arith.constant 0 : i32
    %c0_i32_0 = arith.constant 0 : i32
    %c0_i32_1 = arith.constant 0 : i32
    return %arg0, %c0_i32, %c0_i32_0 : i32, i32, i32
  }
  func.func @transform_1(%arg0: i32) -> (i32, i32, i32) {
    %c0_i32 = arith.constant 0 : i32
    %c0_i32_0 = arith.constant 0 : i32
    %c0_i32_1 = arith.constant 0 : i32
    %c0_i32_2 = arith.constant 0 : i32
    return %c0_i32, %c0_i32_0, %c0_i32_1 : i32, i32, i32
  }
  func.func @transform_2(%arg0: i32) -> (i32, i32) {
    %c0_i32 = arith.constant 0 : i32
    %c0_i32_0 = arith.constant 0 : i32
    %c0_i32_1 = arith.constant 0 : i32
    return %c0_i32, %c0_i32_0 : i32, i32
  }
  func.func @transform_3(%arg0: i32) -> (i32, i32) {
    %c0_i32 = arith.constant 0 : i32
    %c0_i32_0 = arith.constant 0 : i32
    %c0_i32_1 = arith.constant 0 : i32
    return %c0_i32, %c0_i32_0 : i32, i32
  }
  func.func @transform_4(%arg0: i32) -> (i32, i32) {
    %c0_i32 = arith.constant 0 : i32
    %c0_i32_0 = arith.constant 0 : i32
    %c0_i32_1 = arith.constant 0 : i32
    return %c0_i32, %c0_i32_0 : i32, i32
  }
  func.func @transform_5(%arg0: i32) -> (i32, i32, i32) {
    %c0_i32 = arith.constant 0 : i32
    %c0_i32_0 = arith.constant 0 : i32
    %c0_i32_1 = arith.constant 0 : i32
    return %arg0, %c0_i32, %c0_i32_0 : i32, i32, i32
  }
}

</mosaic_0001>

<llo_original>
// kernel: tpu_custom_call.1
$region0: #{tpu_custom_call.1}
  #allocation0 [shape = 'u32[]', space=smem, size = 0x4, offset = 0x4, fixed_abs, tag = 'smem constant byte address 0x4 - core index']
  #allocation1 [shape = 'u32[144,128]{1,0:T(1,128)}', space=vmem, size = 0x12000, scoped, tag = 'internal scratch']
  #allocation2 [shape = 'f32[24,128]{1,0:T(8,128)}', space=vmem, size = 0x3000, scoped, tag = 'scratch operand']
  %s0 = inlined_call_operand.hbm [shape: bf16[2,24,72], index: 0, kind: input, shape index: {}]
  %s1 = inlined_call_operand.hbm [shape: bf16[3,72,128], index: 1, kind: input, shape index: {}]
  %s2 = inlined_call_operand.vmem [shape: f32[1,128], index: 2, kind: input, shape index: {}]
  %s3 = inlined_call_operand.hbm [shape: f32[128,128], index: 3, kind: input, shape index: {}]
  %s4 = inlined_call_operand.vmem [shape: f32[1,128], index: 4, kind: input, shape index: {}]
  %s5 = inlined_call_operand.hbm [shape: f32[2,1,128], index: 5, kind: output, shape index: {}]
  %s6 = sld [smem:[#allocation0]]
  $region65: #{tpu_custom_call.1} parent=0
    _
  %s8 = ssub.s32 1, %s6
  %s9 = scalar_select 0, %s8, %s6
  $region1: #{tpu_custom_call.1} parent=0
    #allocation3 [shape = 'u8[12288]{0}', space=vmem, size = 0x3000, scoped, tag = 'input window, operand 0']
    #allocation4 [shape = 's32[2]{0}', space=sflag, size = 0x8, scoped, tag = 'scoped memory for tpu_custom_call.1']
    #allocation5 [shape = 's32[2]{0}', space=sflag, size = 0x8, scoped, tag = 'scoped memory for tpu_custom_call.1']
    #allocation6 [shape = 'u8[55296]{0}', space=vmem, size = 0xd800, scoped, tag = 'input window, operand 1, single buffered']
    #allocation7 [shape = 's32[1]{0}', space=sflag, size = 0x4, scoped, tag = 'scoped memory for tpu_custom_call.1']
    #allocation8 [shape = 'u8[65536]{0}', space=vmem, size = 0x10000, scoped, tag = 'input window, operand 3, single buffered']
    #allocation9 [shape = 'u8[1024]{0}', space=vmem, size = 0x400, scoped, tag = 'output window, operand 0']
    %10 = vsyncpa [#allocation4], 0
    %s11 = scalar_lea.sflag [#allocation4], 1
    %12 = vsyncpa %s11, 0
    %13 = vsyncpa [#allocation7], 0
    %14 = vsyncpa [#allocation5], 0
    %s15 = scalar_lea.sflag [#allocation5], 1
    %16 = vsyncpa %s15, 0
    loop: start=0, step=1, limit=4
    $region2: #{tpu_custom_call.1} parent=1 // loop_pre_header
      _
    $region3: #{tpu_custom_call.1} parent=1 // loop_header
      %s18 = sphi 0, %s22
      %p19 = scmp.ge.s32.totalorder %s18, 4
      %s28 = sphi 0, %s30
      %s31 = sphi 0, %s28
      %s32 = sphi 0, %s31
      %s48 = sphi 0, %s32
      %s52 = sphi 0, %s52
      %s54 = sphi 0, %s52
      %s55 = sphi 0, %s54
      %s69 = sphi 0, %s55
      %s73 = sphi 0, %s73
      %s75 = sphi 0, %s73
      %s76 = sphi 0, %s75
      %s90 = sphi 0, %s76
      %s94 = sphi 0, %s94
      %s96 = sphi 0, %s94
      %s97 = sphi 0, %s96
      %s111 = sphi 0, %s97
      %s115 = sphi 0, %s115
      %s117 = sphi 0, %s115
      %s118 = sphi 0, %s117
      %s132 = sphi 0, %s118
      %s138 = sphi 0, %s140
      %s141 = sphi 0, %s138
      %s142 = sphi 0, %s141
      %s158 = sphi 0, %s142
    $region4: #{tpu_custom_call.1} parent=1 // loop_header_branch
      %21 = sbr.rel (%p19) target = $region8
    $region5: #{tpu_custom_call.1} parent=1 // loop_body
      %s23 = ssub.s32 %s18, 1
      %s24 = ssub.s32 %s18, 2
      %s25 = sadd.s32 %s18, 1
      %s26 = ssub.s32 %s18, %s25
      %p27 = scmp.eq.s32.totalorder %s26, 0
      %s29 = sadd.s32 %s28, 1
      %s30 = scalar_select %p27, %s28, %s29
      %p33 = pneg %p27
      %p34 = scmp.eq.s32.totalorder %s18, 1
      %p35 = por %p33, %p34
      %p36 = scmp.ne.s32.totalorder %s28, %s31
      %p37 = scmp.eq.s32.totalorder %s18, 0
      %p38 = por %p36, %p37
      %p39 = scmp.ne.s32.totalorder %s28, %s31
      %p40 = scmp.eq.s32.totalorder %s23, 1
      %p41 = por %p39, %p40
      %p42 = scmp.ne.s32.totalorder %s31, %s32
      %p43 = scmp.eq.s32.totalorder %s23, 0
      %p44 = por %p42, %p43
      %p45 = scmp.ne.s32.totalorder %s31, %s32
      %p46 = scmp.eq.s32.totalorder %s24, 1
      %p47 = por %p45, %p46
      %p49 = scmp.ne.s32.totalorder %s32, %s48
      %p50 = scmp.eq.s32.totalorder %s24, 0
      %p51 = por %p49, %p50
      %s53 = sadd.s32 %s52, 1
      %p56 = scmp.eq.s32.totalorder %s18, 1
      %p57 = scmp.ne.s32.totalorder %s52, %s54
      %p58 = scmp.eq.s32.totalorder %s18, 0
      %p59 = por %p57, %p58
      %p60 = scmp.ne.s32.totalorder %s52, %s54
      %p61 = scmp.eq.s32.totalorder %s23, 1
      %p62 = por %p60, %p61
      %p63 = scmp.ne.s32.totalorder %s54, %s55
      %p64 = scmp.eq.s32.totalorder %s23, 0
      %p65 = por %p63, %p64
      %p66 = scmp.ne.s32.totalorder %s54, %s55
      %p67 = scmp.eq.s32.totalorder %s24, 1
      %p68 = por %p66, %p67
      %p70 = scmp.ne.s32.totalorder %s55, %s69
      %p71 = scmp.eq.s32.totalorder %s24, 0
      %p72 = por %p70, %p71
      %s74 = sadd.s32 %s73, 1
      %p77 = scmp.eq.s32.totalorder %s18, 1
      %p78 = scmp.ne.s32.totalorder %s73, %s75
      %p79 = scmp.eq.s32.totalorder %s18, 0
      %p80 = por %p78, %p79
      %p81 = scmp.ne.s32.totalorder %s73, %s75
      %p82 = scmp.eq.s32.totalorder %s23, 1
      %p83 = por %p81, %p82
      %p84 = scmp.ne.s32.totalorder %s75, %s76
      %p85 = scmp.eq.s32.totalorder %s23, 0
      %p86 = por %p84, %p85
      %p87 = scmp.ne.s32.totalorder %s75, %s76
      %p88 = scmp.eq.s32.totalorder %s24, 1
      %p89 = por %p87, %p88
      %p91 = scmp.ne.s32.totalorder %s76, %s90
      %p92 = scmp.eq.s32.totalorder %s24, 0
      %p93 = por %p91, %p92
      %s95 = sadd.s32 %s94, 1
      %p98 = scmp.eq.s32.totalorder %s18, 1
      %p99 = scmp.ne.s32.totalorder %s94, %s96
      %p100 = scmp.eq.s32.totalorder %s18, 0
      %p101 = por %p99, %p100
      %p102 = scmp.ne.s32.totalorder %s94, %s96
      %p103 = scmp.eq.s32.totalorder %s23, 1
      %p104 = por %p102, %p103
      %p105 = scmp.ne.s32.totalorder %s96, %s97
      %p106 = scmp.eq.s32.totalorder %s23, 0
      %p107 = por %p105, %p106
      %p108 = scmp.ne.s32.totalorder %s96, %s97
      %p109 = scmp.eq.s32.totalorder %s24, 1
      %p110 = por %p108, %p109
      %p112 = scmp.ne.s32.totalorder %s97, %s111
      %p113 = scmp.eq.s32.totalorder %s24, 0
      %p114 = por %p112, %p113
      %s116 = sadd.s32 %s115, 1
      %p119 = scmp.eq.s32.totalorder %s18, 1
      %p120 = scmp.ne.s32.totalorder %s115, %s117
      %p121 = scmp.eq.s32.totalorder %s18, 0
      %p122 = por %p120, %p121
      %p123 = scmp.ne.s32.totalorder %s115, %s117
      %p124 = scmp.eq.s32.totalorder %s23, 1
      %p125 = por %p123, %p124
      %p126 = scmp.ne.s32.totalorder %s117, %s118
      %p127 = scmp.eq.s32.totalorder %s23, 0
      %p128 = por %p126, %p127
      %p129 = scmp.ne.s32.totalorder %s117, %s118
      %p130 = scmp.eq.s32.totalorder %s24, 1
      %p131 = por %p129, %p130
      %p133 = scmp.ne.s32.totalorder %s118, %s132
      %p134 = scmp.eq.s32.totalorder %s24, 0
      %p135 = por %p133, %p134
      %s136 = ssub.s32 %s18, %s25
      %p137 = scmp.eq.s32.totalorder %s136, 0
      %s139 = sadd.s32 %s138, 1
      %s140 = scalar_select %p137, %s138, %s139
      %p143 = pneg %p137
      %p144 = scmp.eq.s32.totalorder %s18, 1
      %p145 = por %p143, %p144
      %p146 = scmp.ne.s32.totalorder %s138, %s141
      %p147 = scmp.eq.s32.totalorder %s18, 0
      %p148 = por %p146, %p147
      %p149 = scmp.ne.s32.totalorder %s138, %s141
      %p150 = scmp.eq.s32.totalorder %s23, 1
      %p151 = por %p149, %p150
      %p152 = scmp.ne.s32.totalorder %s141, %s142
      %p153 = scmp.eq.s32.totalorder %s23, 0
      %p154 = por %p152, %p153
      %p155 = scmp.ne.s32.totalorder %s141, %s142
      %p156 = scmp.eq.s32.totalorder %s24, 1
      %p157 = por %p155, %p156
      %p159 = scmp.ne.s32.totalorder %s142, %s158
      %p160 = scmp.eq.s32.totalorder %s24, 0
      %p161 = por %p159, %p160
      %p162 = scmp.le.s32.totalorder 1, %s18
      %p163 = scmp.lt.s32.totalorder %s18, 3
      %p164 = pnand %p162, %p163
      %p165 = pneg %p164
      // Predicated region
      $region9: #{tpu_custom_call.1} parent=5 // pred_check
        _
      $region10: #{tpu_custom_call.1} parent=5 // pred_check_branch
        %167 = sbr.rel (%p164) target = $region12
      $region11: #{tpu_custom_call.1} parent=5 // pred_region
        %s168 = ssub.s32 %s18, 1
        // Predicated region
        $region13: #{tpu_custom_call.1} parent=11 // pred_check
          %p169 = pneg %p65
        $region14: #{tpu_custom_call.1} parent=11 // pred_check_branch
          %171 = sbr.rel (%p169) target = $region16
        $region15: #{tpu_custom_call.1} parent=11 // pred_region
          %s173 = ssub.s32 1728, 1728
          %174 = vsyncadd [#allocation7], %s173
          %s175 = sshll.u32 [#allocation6], 4
          %s176 = int_to_ptr.vmem [resolvable:$true] %s175
          %181 = dma.hbm_to_vmem [thread:$0]  %s1, 1728, %s176, [#allocation7], 64, 64, 4
        $region16: #{tpu_custom_call.1} parent=11 // pred_fallthru
          _
        // Predicated region
        $region17: #{tpu_custom_call.1} parent=11 // pred_check
          %p182 = pneg %p86
        $region18: #{tpu_custom_call.1} parent=11 // pred_check_branch
          %184 = sbr.rel (%p182) target = $region20
        $region19: #{tpu_custom_call.1} parent=11 // pred_region
          _
        $region20: #{tpu_custom_call.1} parent=11 // pred_fallthru
          _
        // Predicated region
        $region21: #{tpu_custom_call.1} parent=11 // pred_check
          %p185 = pneg %p107
        $region22: #{tpu_custom_call.1} parent=11 // pred_check_branch
          %187 = sbr.rel (%p185) target = $region24
        $region23: #{tpu_custom_call.1} parent=11 // pred_region
          %s189 = ssub.s32 2048, 2048
          %190 = vsyncadd [#allocation7], %s189
          %s191 = sshll.u32 [#allocation8], 4
          %s192 = int_to_ptr.vmem [resolvable:$true] %s191
          %197 = dma.hbm_to_vmem [thread:$0]  %s3, 2048, %s192, [#allocation7], 128, 128, 8
        $region24: #{tpu_custom_call.1} parent=11 // pred_fallthru
          _
        // Predicated region
        $region25: #{tpu_custom_call.1} parent=11 // pred_check
          %p198 = pneg %p128
        $region26: #{tpu_custom_call.1} parent=11 // pred_check_branch
          %200 = sbr.rel (%p198) target = $region28
        $region27: #{tpu_custom_call.1} parent=11 // pred_region
          _
        $region28: #{tpu_custom_call.1} parent=11 // pred_fallthru
          _
      $region12: #{tpu_custom_call.1} parent=5 // pred_fallthru
        _
      %p201 = scmp.lt.s32.totalorder %s18, 2
      // Predicated region
      $region29: #{tpu_custom_call.1} parent=5 // pred_check
        %p202 = pneg %p201
      $region30: #{tpu_custom_call.1} parent=5 // pred_check_branch
        %204 = sbr.rel (%p202) target = $region32
      $region31: #{tpu_custom_call.1} parent=5 // pred_region
        // Predicated region
        $region33: #{tpu_custom_call.1} parent=31 // pred_check
          %p205 = pneg %p38
        $region34: #{tpu_custom_call.1} parent=31 // pred_check_branch
          %207 = sbr.rel (%p205) target = $region36
        $region35: #{tpu_custom_call.1} parent=31 // pred_region
          %s208 = sand.u32 %s28, 1
          %s209 = scalar_lea.sflag [#allocation4], %s208
          %s210 = sand.u32 %s28, 1
          %s211 = smul.addr %s210, 12
          %s212 = scalar_lea.vmem [#allocation3], %s211
          %s214 = ssub.s32 192, 192
          %215 = vsyncadd %s209, %s214
          %s216 = smul.addr %s18, 3
          %s217 = smul.addr %s216, 64
          %s218 = scalar_lea.hbm %s0, %s217
          %s219 = sshll.u32 %s212, 4
          %s220 = int_to_ptr.vmem [resolvable:$true] %s219
          %225 = dma.hbm_to_vmem [thread:$0]  %s218, 192, %s220, %s209, 64, 64, 4
        $region36: #{tpu_custom_call.1} parent=31 // pred_fallthru
          _
      $region32: #{tpu_custom_call.1} parent=5 // pred_fallthru
        _
      %p226 = scmp.le.s32.totalorder 1, %s18
      %p227 = scmp.lt.s32.totalorder %s18, 3
      %p228 = pnand %p226, %p227
      %p229 = pneg %p228
      // Predicated region
      $region37: #{tpu_custom_call.1} parent=5 // pred_check
        _
      $region38: #{tpu_custom_call.1} parent=5 // pred_check_branch
        %231 = sbr.rel (%p228) target = $region40
      $region39: #{tpu_custom_call.1} parent=5 // pred_region
        %s232 = ssub.s32 %s18, 1
        %s233 = sand.u32 %s31, 1
        %s234 = scalar_lea.sflag [#allocation4], %s233
        %s235 = sand.u32 %s31, 1
        %s236 = smul.addr %s235, 12
        %s237 = scalar_lea.vmem [#allocation3], %s236
        // Predicated region
        $region41: #{tpu_custom_call.1} parent=39 // pred_check
          %p238 = pneg %p44
        $region42: #{tpu_custom_call.1} parent=39 // pred_check_branch
          %240 = sbr.rel (%p238) target = $region44
        $region43: #{tpu_custom_call.1} parent=39 // pred_region
          %241 = dma.done %s234, 192
        $region44: #{tpu_custom_call.1} parent=39 // pred_fallthru
          _
        // Predicated region
        $region45: #{tpu_custom_call.1} parent=39 // pred_check
          %p242 = pneg %p65
        $region46: #{tpu_custom_call.1} parent=39 // pred_check_branch
          %244 = sbr.rel (%p242) target = $region48
        $region47: #{tpu_custom_call.1} parent=39 // pred_region
          %245 = dma.done [#allocation7], 1728
        $region48: #{tpu_custom_call.1} parent=39 // pred_fallthru
          _
        // Predicated region
        $region49: #{tpu_custom_call.1} parent=39 // pred_check
          %p246 = pneg %p107
        $region50: #{tpu_custom_call.1} parent=39 // pred_check_branch
          %248 = sbr.rel (%p246) target = $region52
        $region51: #{tpu_custom_call.1} parent=39 // pred_region
          %249 = dma.done [#allocation7], 2048
        $region52: #{tpu_custom_call.1} parent=39 // pred_fallthru
          _
        %s250 = sand.u32 %s31, 1
        %s251 = scalar_lea.sflag [#allocation4], %s250
        %s252 = sand.u32 %s31, 1
        %s253 = smul.addr %s252, 12
        %s254 = scalar_lea.vmem [#allocation3], %s253
        %p255 = pneg %p44
        %p256 = pneg %p41
        %p257 = pneg %p65
        %p258 = pneg %p62
        %p259 = pneg %p86
        %p260 = pneg %p83
        %p261 = pneg %p107
        %p262 = pneg %p104
        %p263 = pneg %p128
        %p264 = pneg %p125
        %p265 = pneg %p154
        %p266 = pneg %p151
        %s267 = sand.u32 %s141, 1
        %s268 = scalar_lea.sflag [#allocation5], %s267
        %s269 = sand.u32 %s141, 1
        %s270 = scalar_lea.vmem [#allocation9], %s269
        %v272 = vld [vmem:[%s237] sm:$0xf]
        %v273 = vld [vmem:[%s237 + $0x4] sm:$0xf]
        %v274 = vld [vmem:[%s237 + $0x8] sm:$0xf]
        %v275 = vld [vmem:[#allocation6] sm:$0xf]
        %v276 = vld [vmem:[#allocation6 + $0x4] sm:$0xf]
        %v277 = vld [vmem:[#allocation6 + $0x8] sm:$0xf]
        %v278 = vld [vmem:[#allocation6 + $0xc] sm:$0xf]
        %v279 = vld [vmem:[#allocation6 + $0x10] sm:$0xf]
        %v280 = vld [vmem:[#allocation6 + $0x14] sm:$0xf]
        %v281 = vld [vmem:[#allocation6 + $0x18] sm:$0xf]
        %v282 = vld [vmem:[#allocation6 + $0x1c] sm:$0xf]
        %v283 = vld [vmem:[#allocation6 + $0x20] sm:$0xf]
        %v287 = vunpack.c.l.b16 %v272
        %v288 = vunpack.c.l.b16 %v273
        %v289 = vunpack.c.l.b16 %v274
        %v290 = vpack.c.b16 %v288, %v287
        %v291 = vpack.c.b16 %v289, %v289
        %v301 = vunpack.c.l.b16 %v275
        %v302 = vunpack.c.l.b16 %v276
        %v303 = vunpack.c.l.b16 %v277
        %v304 = vunpack.c.l.b16 %v278
        %v305 = vunpack.c.l.b16 %v279
        %v306 = vunpack.c.l.b16 %v280
        %v307 = vunpack.c.l.b16 %v281
        %v308 = vunpack.c.l.b16 %v282
        %v309 = vunpack.c.l.b16 %v283
        %v310 = vpack.c.b16 %v302, %v301
        %v311 = vpack.c.b16 %v304, %v303
        %v312 = vpack.c.b16 %v306, %v305
        %v313 = vpack.c.b16 %v308, %v307
        %v314 = vpack.c.b16 %v309, %v309
        %vm319 = vcmask 588800
        %v321 = vsel %vm319, %v290, 0
        %v324 = vsel %vm319, %v291, 0
        %vm326 = vcmask 1043456
        %v328 = vsel %vm326, %v314, 0
        %330 = vmatprep.subr.bf16.mxu0 0
        %331 = vmatpush1.bf16.msra.mxu0 %v310
        %332 = vmatprep.subr.bf16.mxu0 0
        %333 = vmatpush1.bf16.msra.mxu0 %v311
        %334 = vmatprep.subr.bf16.mxu0 0
        %335 = vmatpush1.bf16.msra.mxu0 %v312
        %336 = vmatprep.subr.bf16.mxu0 0
        %337 = vmatpush1.bf16.msra.mxu0 %v313
        %338 = vmatprep.subr.bf16.mxu0 0
        %339 = vmatpush1.bf16.msra.mxu0 %v328
        %340 = vmatprep.subr.bf16.mxu0 0
        %341 = vmatpush1.bf16.msra.mxu0 0
        %342 = vmatprep.subr.bf16.mxu0 0
        %343 = vmatpush1.bf16.msra.mxu0 0
        %344 = vmatprep.subr.bf16.mxu0 0
        %345 = vmatpush1.bf16.msra.mxu0 0
        %346 = vmatprep.subr.bf16.mxu0 0
        %347 = vmatpush1.bf16.msra.mxu0 0
        %348 = vmatprep.subr.bf16.mxu0 0
        %349 = vmatpush1.bf16.msra.mxu0 0
        %350 = vmatprep.subr.bf16.mxu0 0
        %351 = vmatpush1.bf16.msra.mxu0 0
        %352 = vmatprep.subr.bf16.mxu0 0
        %353 = vmatpush1.bf16.msra.mxu0 0
        %354 = vmatprep.subr.bf16.mxu0 0
        %355 = vmatpush1.bf16.msra.mxu0 0
        %356 = vmatprep.subr.bf16.mxu0 0
        %357 = vmatpush1.bf16.msra.mxu0 0
        %358 = vmatprep.subr.bf16.mxu0 0
        %359 = vmatpush1.bf16.msra.mxu0 0
        %360 = vmatprep.subr.bf16.mxu0 0
        %361 = vmatpush1.bf16.msra.mxu0 0
        %362 = vmatprep.mubr.bf16.mxu0 0
        %363 = vmatmul.mubr.bf16.gmra.mrb[0].mxu0 %v321
        %v364 = vpop.f32.mrb[0].mxu0
        %v365 = vadd.f32 0.0, %v364
        %v366 = vpop.f32.mrb[0].mxu0
        %v367 = vpop.f32.mrb[0].mxu0
        %v368 = vadd.f32 0.0, %v367
        %v369 = vpop.f32.mrb[0].mxu0
        %370 = vmatprep.mubr.bf16.mxu0 0
        %371 = vmatmul.mubr.bf16.gmra.mrb[0].mxu0 %v324
        %v372 = vpop.f32.mrb[0].mxu0
        %v373 = vadd.f32 0.0, %v372
        %v374 = vpop.f32.mrb[0].mxu0
        %v375 = vpop.f32.mrb[0].mxu0
        %v376 = vpop.f32.mrb[0].mxu0
        %377 = vdwg.mxu0
        %378 = vst [vmem:[#allocation2] sm:$0xff] %v365
        %379 = vst [vmem:[#allocation2 + $0x8] sm:$0xff] %v368
        %380 = vst [vmem:[#allocation2 + $0x10] sm:$0xff] %v373
        %v381 = vld [vmem:[#allocation2] sm:$0xff]
        %v382 = vld [vmem:[#allocation2 + $0x8] sm:$0xff]
        %v383 = vadd.f32 %v381, 0.0
        %v384 = vadd.f32 %v382, 0.0
        %s385 = scalar_lea.vmem [#allocation6], 36
        %v386 = vld [vmem:[%s385] sm:$0xf]
        %v387 = vld [vmem:[%s385 + $0x4] sm:$0xf]
        %v388 = vld [vmem:[%s385 + $0x8] sm:$0xf]
        %v389 = vld [vmem:[%s385 + $0xc] sm:$0xf]
        %v390 = vld [vmem:[%s385 + $0x10] sm:$0xf]
        %v391 = vld [vmem:[%s385 + $0x14] sm:$0xf]
        %v392 = vld [vmem:[%s385 + $0x18] sm:$0xf]
        %v393 = vld [vmem:[%s385 + $0x1c] sm:$0xf]
        %v394 = vld [vmem:[%s385 + $0x20] sm:$0xf]
        %v404 = vunpack.c.l.b16 %v386
        %v405 = vunpack.c.l.b16 %v387
        %v406 = vunpack.c.l.b16 %v388
        %v407 = vunpack.c.l.b16 %v389
        %v408 = vunpack.c.l.b16 %v390
        %v409 = vunpack.c.l.b16 %v391
        %v410 = vunpack.c.l.b16 %v392
        %v411 = vunpack.c.l.b16 %v393
        %v412 = vunpack.c.l.b16 %v394
        %v413 = vpack.c.b16 %v405, %v404
        %v414 = vpack.c.b16 %v407, %v406
        %v415 = vpack.c.b16 %v409, %v408
        %v416 = vpack.c.b16 %v411, %v410
        %v417 = vpack.c.b16 %v412, %v412
        %v423 = vsel %vm326, %v417, 0
        %425 = vmatprep.subr.bf16.mxu0 0
        %426 = vmatpush1.bf16.msra.mxu0 %v413
        %427 = vmatprep.subr.bf16.mxu0 0
        %428 = vmatpush1.bf16.msra.mxu0 %v414
        %429 = vmatprep.subr.bf16.mxu0 0
        %430 = vmatpush1.bf16.msra.mxu0 %v415
        %431 = vmatprep.subr.bf16.mxu0 0
        %432 = vmatpush1.bf16.msra.mxu0 %v416
        %433 = vmatprep.subr.bf16.mxu0 0
        %434 = vmatpush1.bf16.msra.mxu0 %v423
        %435 = vmatprep.subr.bf16.mxu0 0
        %436 = vmatpush1.bf16.msra.mxu0 0
        %437 = vmatprep.subr.bf16.mxu0 0
        %438 = vmatpush1.bf16.msra.mxu0 0
        %439 = vmatprep.subr.bf16.mxu0 0
        %440 = vmatpush1.bf16.msra.mxu0 0
        %441 = vmatprep.subr.bf16.mxu0 0
        %442 = vmatpush1.bf16.msra.mxu0 0
        %443 = vmatprep.subr.bf16.mxu0 0
        %444 = vmatpush1.bf16.msra.mxu0 0
        %445 = vmatprep.subr.bf16.mxu0 0
        %446 = vmatpush1.bf16.msra.mxu0 0
        %447 = vmatprep.subr.bf16.mxu0 0
        %448 = vmatpush1.bf16.msra.mxu0 0
        %449 = vmatprep.subr.bf16.mxu0 0
        %450 = vmatpush1.bf16.msra.mxu0 0
        %451 = vmatprep.subr.bf16.mxu0 0
        %452 = vmatpush1.bf16.msra.mxu0 0
        %453 = vmatprep.subr.bf16.mxu0 0
        %454 = vmatpush1.bf16.msra.mxu0 0
        %455 = vmatprep.subr.bf16.mxu0 0
        %456 = vmatpush1.bf16.msra.mxu0 0
        %457 = vmatprep.mubr.bf16.mxu0 0
        %458 = vmatmul.mubr.bf16.gmra.mrb[0].mxu0 %v321
        %v459 = vpop.f32.mrb[0].mxu0
        %v460 = vadd.f32 0.0, %v459
        %v461 = vpop.f32.mrb[0].mxu0
        %v462 = vpop.f32.mrb[0].mxu0
        %v463 = vadd.f32 0.0, %v462
        %v464 = vpop.f32.mrb[0].mxu0
        %465 = vmatprep.mubr.bf16.mxu0 0
        %466 = vmatmul.mubr.bf16.gmra.mrb[0].mxu0 %v324
        %v467 = vpop.f32.mrb[0].mxu0
        %v468 = vadd.f32 0.0, %v467
        %v469 = vpop.f32.mrb[0].mxu0
        %v470 = vpop.f32.mrb[0].mxu0
        %v471 = vpop.f32.mrb[0].mxu0
        %472 = vdwg.mxu0
        %473 = vst [vmem:[#allocation2] sm:$0xff] %v460
        %474 = vst [vmem:[#allocation2 + $0x8] sm:$0xff] %v463
        %475 = vst [vmem:[#allocation2 + $0x10] sm:$0xff] %v468
        %v476 = vld [vmem:[#allocation2 + $0x1] sm:$0xff]
        %v477 = vld [vmem:[#allocation2 + $0x9] sm:$0xff]
        %v478 = vadd.f32 %v383, %v476
        %v479 = vadd.f32 %v384, %v477
        %s480 = scalar_lea.vmem [#allocation6], 72
        %v481 = vld [vmem:[%s480] sm:$0xf]
        %v482 = vld [vmem:[%s480 + $0x4] sm:$0xf]
        %v483 = vld [vmem:[%s480 + $0x8] sm:$0xf]
        %v484 = vld [vmem:[%s480 + $0xc] sm:$0xf]
        %v485 = vld [vmem:[%s480 + $0x10] sm:$0xf]
        %v486 = vld [vmem:[%s480 + $0x14] sm:$0xf]
        %v487 = vld [vmem:[%s480 + $0x18] sm:$0xf]
        %v488 = vld [vmem:[%s480 + $0x1c] sm:$0xf]
        %v489 = vld [vmem:[%s480 + $0x20] sm:$0xf]
        %v499 = vunpack.c.l.b16 %v481
        %v500 = vunpack.c.l.b16 %v482
        %v501 = vunpack.c.l.b16 %v483
        %v502 = vunpack.c.l.b16 %v484
        %v503 = vunpack.c.l.b16 %v485
        %v504 = vunpack.c.l.b16 %v486
        %v505 = vunpack.c.l.b16 %v487
        %v506 = vunpack.c.l.b16 %v488
        %v507 = vunpack.c.l.b16 %v489
        %v508 = vpack.c.b16 %v500, %v499
        %v509 = vpack.c.b16 %v502, %v501
        %v510 = vpack.c.b16 %v504, %v503
        %v511 = vpack.c.b16 %v506, %v505
        %v512 = vpack.c.b16 %v507, %v507
        %v518 = vsel %vm326, %v512, 0
        %520 = vmatprep.subr.bf16.mxu0 0
        %521 = vmatpush1.bf16.msra.mxu0 %v508
        %522 = vmatprep.subr.bf16.mxu0 0
        %523 = vmatpush1.bf16.msra.mxu0 %v509
        %524 = vmatprep.subr.bf16.mxu0 0
        %525 = vmatpush1.bf16.msra.mxu0 %v510
        %526 = vmatprep.subr.bf16.mxu0 0
        %527 = vmatpush1.bf16.msra.mxu0 %v511
        %528 = vmatprep.subr.bf16.mxu0 0
        %529 = vmatpush1.bf16.msra.mxu0 %v518
        %530 = vmatprep.subr.bf16.mxu0 0
        %531 = vmatpush1.bf16.msra.mxu0 0
        %532 = vmatprep.subr.bf16.mxu0 0
        %533 = vmatpush1.bf16.msra.mxu0 0
        %534 = vmatprep.subr.bf16.mxu0 0
        %535 = vmatpush1.bf16.msra.mxu0 0
        %536 = vmatprep.subr.bf16.mxu0 0
        %537 = vmatpush1.bf16.msra.mxu0 0
        %538 = vmatprep.subr.bf16.mxu0 0
        %539 = vmatpush1.bf16.msra.mxu0 0
        %540 = vmatprep.subr.bf16.mxu0 0
        %541 = vmatpush1.bf16.msra.mxu0 0
        %542 = vmatprep.subr.bf16.mxu0 0
        %543 = vmatpush1.bf16.msra.mxu0 0
        %544 = vmatprep.subr.bf16.mxu0 0
        %545 = vmatpush1.bf16.msra.mxu0 0
        %546 = vmatprep.subr.bf16.mxu0 0
        %547 = vmatpush1.bf16.msra.mxu0 0
        %548 = vmatprep.subr.bf16.mxu0 0
        %549 = vmatpush1.bf16.msra.mxu0 0
        %550 = vmatprep.subr.bf16.mxu0 0
        %551 = vmatpush1.bf16.msra.mxu0 0
        %552 = vmatprep.mubr.bf16.mxu0 0
        %553 = vmatmul.mubr.bf16.gmra.mrb[0].mxu0 %v321
        %v554 = vpop.f32.mrb[0].mxu0
        %v555 = vadd.f32 0.0, %v554
        %v556 = vpop.f32.mrb[0].mxu0
        %v557 = vpop.f32.mrb[0].mxu0
        %v558 = vadd.f32 0.0, %v557
        %v559 = vpop.f32.mrb[0].mxu0
        %560 = vmatprep.mubr.bf16.mxu0 0
        %561 = vmatmul.mubr.bf16.gmra.mrb[0].mxu0 %v324
        %v562 = vpop.f32.mrb[0].mxu0
        %v563 = vadd.f32 0.0, %v562
        %v564 = vpop.f32.mrb[0].mxu0
        %v565 = vpop.f32.mrb[0].mxu0
        %v566 = vpop.f32.mrb[0].mxu0
        %567 = vdwg.mxu0
        %568 = vst [vmem:[#allocation2] sm:$0xff] %v555
        %569 = vst [vmem:[#allocation2 + $0x8] sm:$0xff] %v558
        %570 = vst [vmem:[#allocation2 + $0x10] sm:$0xff] %v563
        %v571 = vld [vmem:[#allocation2 + $0x2] sm:$0xff]
        %v572 = vld [vmem:[#allocation2 + $0xa] sm:$0xff]
        %v573 = vadd.f32 %v478, %v571
        %v574 = vadd.f32 %v479, %v572
        %v575 = vld [vmem:[%s2] sm:$0x1]
        %v577 = vlaneseq
        %v578 = vshrl.u32 %v577, 7
        %v579 = vsub.s32 0, %v578
        %v580 = vrot.slane %v575, %v579
        %v582 = vadd.f32 %v573, %v580
        %v583 = vadd.f32 %v574, %v580
        %v584 = vmax.f32 %v582, 0.0
        %v585 = vmax.f32 %v583, 0.0
        %v586 = vadd.f32 %v584, %v585
        %v587 = vrot.slane %v586, 4
        %v588 = vadd.f32 %v586, %v587
        %v589 = vrot.slane %v588, 2
        %v590 = vadd.f32 %v588, %v589
        %v591 = vrot.slane %v590, 1
        %v592 = vadd.f32 %v590, %v591
        %v593 = vld [vmem:[#allocation8] sm:$0xff]
        %v594 = vld [vmem:[#allocation8 + $0x8] sm:$0xff]
        %v595 = vld [vmem:[#allocation8 + $0x10] sm:$0xff]
        %v596 = vld [vmem:[#allocation8 + $0x18] sm:$0xff]
        %v597 = vld [vmem:[#allocation8 + $0x20] sm:$0xff]
        %v598 = vld [vmem:[#allocation8 + $0x28] sm:$0xff]
        %v599 = vld [vmem:[#allocation8 + $0x30] sm:$0xff]
        %v600 = vld [vmem:[#allocation8 + $0x38] sm:$0xff]
        %v601 = vld [vmem:[#allocation8 + $0x40] sm:$0xff]
        %v602 = vld [vmem:[#allocation8 + $0x48] sm:$0xff]
        %v603 = vld [vmem:[#allocation8 + $0x50] sm:$0xff]
        %v604 = vld [vmem:[#allocation8 + $0x58] sm:$0xff]
        %v605 = vld [vmem:[#allocation8 + $0x60] sm:$0xff]
        %v606 = vld [vmem:[#allocation8 + $0x68] sm:$0xff]
        %v607 = vld [vmem:[#allocation8 + $0x70] sm:$0xff]
        %v608 = vld [vmem:[#allocation8 + $0x78] sm:$0xff]
        %v609 = vld [vmem:[%s4] sm:$0x1]
        %610 = vmatprep.subr.mxu0 0.0
        %611 = vmatpush1.msra.mxu0 %v593
        %612 = vmatprep.subr.mxu0 0.0
        %613 = vmatpush1.msra.mxu0 %v594
        %614 = vmatprep.subr.mxu0 0.0
        %615 = vmatpush1.msra.mxu0 %v595
        %616 = vmatprep.subr.mxu0 0.0
        %617 = vmatpush1.msra.mxu0 %v596
        %618 = vmatprep.subr.mxu0 0.0
        %619 = vmatpush1.msra.mxu0 %v597
        %620 = vmatprep.subr.mxu0 0.0
        %621 = vmatpush1.msra.mxu0 %v598
        %622 = vmatprep.subr.mxu0 0.0
        %623 = vmatpush1.msra.mxu0 %v599
        %624 = vmatprep.subr.mxu0 0.0
        %625 = vmatpush1.msra.mxu0 %v600
        %626 = vmatprep.subr.mxu0 0.0
        %627 = vmatpush1.msra.mxu0 %v601
        %628 = vmatprep.subr.mxu0 0.0
        %629 = vmatpush1.msra.mxu0 %v602
        %630 = vmatprep.subr.mxu0 0.0
        %631 = vmatpush1.msra.mxu0 %v603
        %632 = vmatprep.subr.mxu0 0.0
        %633 = vmatpush1.msra.mxu0 %v604
        %634 = vmatprep.subr.mxu0 0.0
        %635 = vmatpush1.msra.mxu0 %v605
        %636 = vmatprep.subr.mxu0 0.0
        %637 = vmatpush1.msra.mxu0 %v606
        %638 = vmatprep.subr.mxu0 0.0
        %639 = vmatpush1.msra.mxu0 %v607
        %640 = vmatprep.subr.mxu0 0.0
        %641 = vmatpush1.msra.mxu0 %v608
        %642 = vmatprep.subr.mxu0 0.0
        %643 = vmatpush1.msra.mxu0 0.0
        %644 = vmatprep.subr.mxu0 0.0
        %645 = vmatpush1.msra.mxu0 0.0
        %646 = vmatprep.subr.mxu0 0.0
        %647 = vmatpush1.msra.mxu0 0.0
        %648 = vmatprep.subr.mxu0 0.0
        %649 = vmatpush1.msra.mxu0 0.0
        %650 = vmatprep.subr.mxu0 0.0
        %651 = vmatpush1.msra.mxu0 0.0
        %652 = vmatprep.subr.mxu0 0.0
        %653 = vmatpush1.msra.mxu0 0.0
        %654 = vmatprep.subr.mxu0 0.0
        %655 = vmatpush1.msra.mxu0 0.0
        %656 = vmatprep.subr.mxu0 0.0
        %657 = vmatpush1.msra.mxu0 0.0
        %658 = vmatprep.subr.mxu0 0.0
        %659 = vmatpush1.msra.mxu0 0.0
        %660 = vmatprep.subr.mxu0 0.0
        %661 = vmatpush1.msra.mxu0 0.0
        %662 = vmatprep.subr.mxu0 0.0
        %663 = vmatpush1.msra.mxu0 0.0
        %664 = vmatprep.subr.mxu0 0.0
        %665 = vmatpush1.msra.mxu0 0.0
        %666 = vmatprep.subr.mxu0 0.0
        %667 = vmatpush1.msra.mxu0 0.0
        %668 = vmatprep.subr.mxu0 0.0
        %669 = vmatpush1.msra.mxu0 0.0
        %670 = vmatprep.subr.mxu0 0.0
        %671 = vmatpush1.msra.mxu0 0.0
        %672 = vmatprep.subr.mxu0 0.0
        %673 = vmatpush1.msra.mxu0 0.0
        %674 = vmatprep.mubr.f32.mxu0 0.0
        %675 = vmatmul.mubr.f32.gmra.mrb[0].mxu0 %v592
        %v676 = vpop.f32.mrb[0].mxu0
        %v677 = vadd.f32 %v609, %v676
        %v678 = vpop.f32.mrb[0].mxu0
        %679 = vdwg.mxu0
        %680 = vst [vmem:[%s270] sm:$0x1] %v677
        %s681 = sand.u32 %s141, 1
        %s682 = scalar_lea.sflag [#allocation5], %s681
        %s683 = sand.u32 %s141, 1
        %s684 = scalar_lea.vmem [#allocation9], %s683
        // Predicated region
        $region53: #{tpu_custom_call.1} parent=39 // pred_check
          %p685 = pneg %p151
        $region54: #{tpu_custom_call.1} parent=39 // pred_check_branch
          %687 = sbr.rel (%p685) target = $region56
        $region55: #{tpu_custom_call.1} parent=39 // pred_region
          %s689 = ssub.s32 16, 16
          %690 = vsyncadd %s682, %s689
          %s691 = smul.addr %s23, 16
          %s692 = scalar_lea.hbm %s5, %s691
          %s694 = sshll.u32 %s684, 4
          %s695 = int_to_ptr.vmem [resolvable:$true] %s694
          %697 = dma.vmem_to_hbm [thread:$0]  %s695, 16, %s692, %s682
        $region56: #{tpu_custom_call.1} parent=39 // pred_fallthru
          _
      $region40: #{tpu_custom_call.1} parent=5 // pred_fallthru
        _
      %p698 = scmp.le.s32.totalorder 2, %s18
      // Predicated region
      $region57: #{tpu_custom_call.1} parent=5 // pred_check
        %p699 = pneg %p698
      $region58: #{tpu_custom_call.1} parent=5 // pred_check_branch
        %701 = sbr.rel (%p699) target = $region60
      $region59: #{tpu_custom_call.1} parent=5 // pred_region
        %s702 = ssub.s32 %s18, 2
        // Predicated region
        $region61: #{tpu_custom_call.1} parent=59 // pred_check
          %p703 = pneg %p157
        $region62: #{tpu_custom_call.1} parent=59 // pred_check_branch
          %705 = sbr.rel (%p703) target = $region64
        $region63: #{tpu_custom_call.1} parent=59 // pred_region
          %s706 = sand.u32 %s142, 1
          %s707 = scalar_lea.sflag [#allocation5], %s706
          %s708 = sand.u32 %s142, 1
          %s709 = scalar_lea.vmem [#allocation9], %s708
          %710 = dma.done %s707, 16
        $region64: #{tpu_custom_call.1} parent=59 // pred_fallthru
          _
      $region60: #{tpu_custom_call.1} parent=5 // pred_fallthru
        _
    $region6: #{tpu_custom_call.1} parent=1 // loop_footer
      %s22 = sadd.s32 1, %s18
    $region7: #{tpu_custom_call.1} parent=1 // loop_footer_branch
      %17 = sbr.rel target = $region3
    $region8: #{tpu_custom_call.1} parent=1 // loop_exit
      _
    %711 = vsyncpa [#allocation4], 1
    %s712 = scalar_lea.sflag [#allocation4], 1
    %713 = vsyncpa %s712, 1
    %714 = vsyncpa [#allocation7], 1
    %715 = vsyncpa [#allocation5], 1
    %s716 = scalar_lea.sflag [#allocation5], 1
    %717 = vsyncpa %s716, 1

</llo_original>
